<compile_context>
chip_gen: v6e
topology: v6e:2x2x1
jax: 0.10.0
libtpu: 0.0.40
codegen_flags: <defaults>
</compile_context>

<pallas_src>
import jax
import jax.numpy as jnp
from jax.experimental import pallas as pl
from jax.experimental.pallas import tpu as pltpu

LANE = 128     # lane width (last dim) used for padding the *hidden* dims only


def _round_up(v: int, m: int) -> int:
    return (v + m - 1) // m * m


def _choose_batch_tile(batch: int) -> int:
    """Batch tile: whole batch for small inputs; otherwise >=2 blocks (v7x dual-TC),
    128-row aligned (dense f32/bf16 sublane tiling), capped at 1024 rows."""
    if batch <= 256:
        return batch                      # block dim == full array dim: always legal
    return min(1024, _round_up(-(-batch // 2), 128))


def mlp_kernel(x_ref, w1_ref, b1_ref, w2_ref, b2_ref, w3_ref, b3_ref, o_ref):
    # Layer 1: Linear + ReLU  (bf16 MXU inputs, fp32 accumulate, fp32 elementwise)
    x = x_ref[...].astype(jnp.bfloat16)
    h1 = jnp.dot(x, w1_ref[...], preferred_element_type=jnp.float32)
    h1 = jnp.maximum(h1 + b1_ref[...], 0.0)
    # Layer 2: Linear + ReLU
    h2 = jnp.dot(h1.astype(jnp.bfloat16), w2_ref[...],
                 preferred_element_type=jnp.float32)
    h2 = jnp.maximum(h2 + b2_ref[...], 0.0)
    # Output layer: Linear (no activation)
    out = jnp.dot(h2.astype(jnp.bfloat16), w3_ref[...],
                  preferred_element_type=jnp.float32)
    o_ref[...] = (out + b3_ref[...]).astype(o_ref.dtype)


def prepare_params(params):
    """One-time (outside the per-call hot path): pad hidden dims to 128 lanes and
    cast weights to bf16. Zero padding is exact for a Linear/ReLU stack (padded
    hidden units stay exactly 0). Input/output feature dims are left unpadded."""
    in_dim, h1 = params["w1"].shape
    _, h2 = params["w2"].shape
    _, out_dim = params["w3"].shape
    h1p, h2p = _round_up(h1, LANE), _round_up(h2, LANE)

    w1 = jnp.zeros((in_dim, h1p), jnp.bfloat16).at[:, :h1].set(
        params["w1"].astype(jnp.bfloat16))
    w2 = jnp.zeros((h1p, h2p), jnp.bfloat16).at[:h1, :h2].set(
        params["w2"].astype(jnp.bfloat16))
    w3 = jnp.zeros((h2p, out_dim), jnp.bfloat16).at[:h2, :].set(
        params["w3"].astype(jnp.bfloat16))
    b1 = jnp.zeros((1, h1p), jnp.float32).at[:, :h1].set(params["b1"])
    b2 = jnp.zeros((1, h2p), jnp.float32).at[:, :h2].set(params["b2"])
    b3 = params["b3"].astype(jnp.float32)          # (1, out_dim), unpadded
    return {"w1": w1, "b1": b1, "w2": w2, "b2": b2, "w3": w3, "b3": b3}


@jax.jit
def mlp_forward(x, prepped):
    """x: (batch, input_dim) fp32 or bf16. prepped: output of prepare_params()."""
    batch, in_dim = x.shape
    w1, b1 = prepped["w1"], prepped["b1"]
    w2, b2 = prepped["w2"], prepped["b2"]
    w3, b3 = prepped["w3"], prepped["b3"]
    h1p = w1.shape[1]
    h2p = w2.shape[1]
    out_dim = w3.shape[1]

    tb = _choose_batch_tile(batch)
    grid = (pl.cdiv(batch, tb),)          # ragged last block handled by Pallas

    # VMEM budget: double-buffered x/out tiles + (double-buffered) resident
    # weights/biases.  Clamp to [32, 48] MiB — safe on v7x (64 MiB physical);
    # on v5e/v6e (128 MiB) this could be raised for very large hidden dims.
    x_item = jnp.dtype(x.dtype).itemsize
    weight_bytes = (w1.size + w2.size + w3.size) * 2
    bias_bytes = (b1.size + b2.size + b3.size) * 4
    tile_bytes = 2 * (tb * in_dim * x_item + tb * out_dim * 4)
    vmem_need = tile_bytes + 2 * (weight_bytes + bias_bytes)
    vmem_limit = int(min(max(2 * vmem_need, 32 * 1024 * 1024), 48 * 1024 * 1024))

    flops = 2 * batch * (in_dim * h1p + h1p * h2p + h2p * out_dim)
    bytes_accessed = (x.size * x_item + weight_bytes + bias_bytes
                      + batch * out_dim * 4)

    def resident(shape):
        # Constant block index -> tensor stays resident in VMEM across batch tiles.
        return pl.BlockSpec(shape, lambda i: (0, 0))

    return pl.pallas_call(
        mlp_kernel,
        out_shape=jax.ShapeDtypeStruct((batch, out_dim), jnp.float32),
        grid=grid,
        in_specs=[
            pl.BlockSpec((tb, in_dim), lambda i: (i, 0)),   # x: batch-tiled, unpadded
            resident((in_dim, h1p)), resident((1, h1p)),    # w1, b1
            resident((h1p, h2p)), resident((1, h2p)),       # w2, b2
            resident((h2p, out_dim)), resident((1, out_dim)),  # w3, b3
        ],
        out_specs=pl.BlockSpec((tb, out_dim), lambda i: (i, 0)),  # unpadded output
        compiler_params=pltpu.CompilerParams(
            dimension_semantics=("parallel",),
            vmem_limit_bytes=vmem_limit),
        cost_estimate=pl.CostEstimate(
            flops=flops, bytes_accessed=bytes_accessed, transcendentals=0),
    )(x, w1, b1, w2, b2, w3, b3)


def init_params(key, input_dim, output_dim, hidden_dims=(64, 64)):
    """Deterministic init mimicking nn.Linear default (uniform +/- 1/sqrt(fan_in)).
    Weights stored as (in_dim, out_dim)."""
    dims = [input_dim, *hidden_dims, output_dim]
    params = {}
    for i in range(len(dims) - 1):
        key, kw, kb = jax.random.split(key, 3)
        fan_in, fan_out = dims[i], dims[i + 1]
        bound = 1.0 / jnp.sqrt(fan_in)
        params[f"w{i+1}"] = jax.random.uniform(
            kw, (fan_in, fan_out), jnp.float32, -bound, bound)
        params[f"b{i+1}"] = jax.random.uniform(
            kb, (1, fan_out), jnp.float32, -bound, bound)
    return params


if __name__ == "__main__":
    key = jax.random.PRNGKey(0)
    batch, input_dim, output_dim = 2, 32, 8

    key, kx = jax.random.split(key)
    x = jax.random.normal(kx, (batch, input_dim), jnp.float32)
    params = init_params(key, input_dim, output_dim, hidden_dims=(64, 64))

    prepped = prepare_params(params)      # one-time prep, hoisted out of the hot path
    out = mlp_forward(x, prepped)
    jax.block_until_ready(out)

    # Pure-JAX fp32 reference (kernel uses bf16 MXU inputs with fp32 accumulation,
    # so compare with a bf16-appropriate tolerance).
    def ref(x, p):
        h = jnp.maximum(x @ p["w1"] + p["b1"], 0.0)
        h = jnp.maximum(h @ p["w2"] + p["b2"], 0.0)
        return h @ p["w3"] + p["b3"]

    expected = ref(x, params)
    assert out.shape == (batch, output_dim)
    assert jnp.allclose(out, expected, atol=3e-2, rtol=3e-2), (
        jnp.max(jnp.abs(out - expected)))

    print("KERNEL_OK")
</pallas_src>

<mosaic_0001>
module attributes {stable_mosaic.version = 11 : i64} {
  func.func @mlp_kernel(%arg0: i32, %arg1: memref<2x32xf32, #tpu.memory_space<vmem>>, %arg2: memref<32x128xbf16, #tpu.memory_space<vmem>>, %arg3: memref<1x128xf32, #tpu.memory_space<vmem>>, %arg4: memref<128x128xbf16, #tpu.memory_space<vmem>>, %arg5: memref<1x128xf32, #tpu.memory_space<vmem>>, %arg6: memref<128x8xbf16, #tpu.memory_space<vmem>>, %arg7: memref<1x8xf32, #tpu.memory_space<vmem>>, %arg8: memref<2x8xf32, #tpu.memory_space<vmem>>) attributes {dimension_semantics = [#tpu.dimension_semantics<parallel>], iteration_bounds = array<i64: 1>, scalar_prefetch = 0 : i64, scratch_operands = 0 : i64, tpu.core_type = #tpu.core_type<tc>, window_params = [{transform_indices = @transform_0, window_bounds = array<i64: 2, 32>}, {pipeline_mode = #tpu.pipeline_mode<synchronous>, transform_indices = @transform_1, window_bounds = array<i64: 32, 128>}, {pipeline_mode = #tpu.pipeline_mode<synchronous>, transform_indices = @transform_2, window_bounds = array<i64: 1, 128>}, {pipeline_mode = #tpu.pipeline_mode<synchronous>, transform_indices = @transform_3, window_bounds = array<i64: 128, 128>}, {pipeline_mode = #tpu.pipeline_mode<synchronous>, transform_indices = @transform_4, window_bounds = array<i64: 1, 128>}, {pipeline_mode = #tpu.pipeline_mode<synchronous>, transform_indices = @transform_5, window_bounds = array<i64: 128, 8>}, {pipeline_mode = #tpu.pipeline_mode<synchronous>, transform_indices = @transform_6, window_bounds = array<i64: 1, 8>}, {transform_indices = @transform_7, window_bounds = array<i64: 2, 8>}]} {
    %c0 = arith.constant 0 : index
    %c0_0 = arith.constant 0 : index
    %0 = vector.load %arg1[%c0, %c0_0] : memref<2x32xf32, #tpu.memory_space<vmem>>, vector<2x32xf32>
    %1 = arith.truncf %0 : vector<2x32xf32> to vector<2x32xbf16>
    %c0_1 = arith.constant 0 : index
    %c0_2 = arith.constant 0 : index
    %2 = vector.load %arg2[%c0_1, %c0_2] : memref<32x128xbf16, #tpu.memory_space<vmem>>, vector<32x128xbf16>
    %cst = arith.constant dense<0.000000e+00> : vector<2x128xf32>
    %3 = tpu.matmul %1, %2, %cst {dimension_numbers = #tpu.dot_dimension_numbers<[1], [0], [0], [1], [0, 0, 1, 1], [], []>} : vector<2x32xbf16>, vector<32x128xbf16>, vector<2x128xf32> -> vector<2x128xf32>
    %c0_3 = arith.constant 0 : index
    %c0_4 = arith.constant 0 : index
    %4 = vector.load %arg3[%c0_3, %c0_4] : memref<1x128xf32, #tpu.memory_space<vmem>>, vector<1x128xf32>
    %5 = vector.broadcast %4 : vector<1x128xf32> to vector<2x128xf32>
    %6 = arith.addf %3, %5 : vector<2x128xf32>
    %cst_5 = arith.constant 0.000000e+00 : f32
    %7 = vector.broadcast %cst_5 : f32 to vector<2x128xf32>
    %8 = arith.maximumf %6, %7 : vector<2x128xf32>
    %9 = arith.truncf %8 : vector<2x128xf32> to vector<2x128xbf16>
    %c0_6 = arith.constant 0 : index
    %c0_7 = arith.constant 0 : index
    %10 = vector.load %arg4[%c0_6, %c0_7] : memref<128x128xbf16, #tpu.memory_space<vmem>>, vector<128x128xbf16>
    %cst_8 = arith.constant dense<0.000000e+00> : vector<2x128xf32>
    %11 = tpu.matmul %9, %10, %cst_8 {dimension_numbers = #tpu.dot_dimension_numbers<[1], [0], [0], [1], [0, 0, 1, 1], [], []>} : vector<2x128xbf16>, vector<128x128xbf16>, vector<2x128xf32> -> vector<2x128xf32>
    %c0_9 = arith.constant 0 : index
    %c0_10 = arith.constant 0 : index
    %12 = vector.load %arg5[%c0_9, %c0_10] : memref<1x128xf32, #tpu.memory_space<vmem>>, vector<1x128xf32>
    %13 = vector.broadcast %12 : vector<1x128xf32> to vector<2x128xf32>
    %14 = arith.addf %11, %13 : vector<2x128xf32>
    %cst_11 = arith.constant 0.000000e+00 : f32
    %15 = vector.broadcast %cst_11 : f32 to vector<2x128xf32>
    %16 = arith.maximumf %14, %15 : vector<2x128xf32>
    %17 = arith.truncf %16 : vector<2x128xf32> to vector<2x128xbf16>
    %c0_12 = arith.constant 0 : index
    %c0_13 = arith.constant 0 : index
    %18 = vector.load %arg6[%c0_12, %c0_13] : memref<128x8xbf16, #tpu.memory_space<vmem>>, vector<128x8xbf16>
    %cst_14 = arith.constant dense<0.000000e+00> : vector<2x8xf32>
    %19 = tpu.matmul %17, %18, %cst_14 {dimension_numbers = #tpu.dot_dimension_numbers<[1], [0], [0], [1], [0, 0, 1, 1], [], []>} : vector<2x128xbf16>, vector<128x8xbf16>, vector<2x8xf32> -> vector<2x8xf32>
    %c0_15 = arith.constant 0 : index
    %c0_16 = arith.constant 0 : index
    %20 = vector.load %arg7[%c0_15, %c0_16] : memref<1x8xf32, #tpu.memory_space<vmem>>, vector<1x8xf32>
    %21 = vector.broadcast %20 : vector<1x8xf32> to vector<2x8xf32>
    %22 = arith.addf %19, %21 : vector<2x8xf32>
    %c0_17 = arith.constant 0 : index
    %c0_18 = arith.constant 0 : index
    %23 = vector.load %arg8[%c0_17, %c0_18] : memref<2x8xf32, #tpu.memory_space<vmem>>, vector<2x8xf32>
    tpu.vector_store %arg8[%c0_17, %c0_18], %22 {strides = array<i32>} : memref<2x8xf32, #tpu.memory_space<vmem>>, vector<2x8xf32>,
    return
  }
  func.func @transform_0(%arg0: i32) -> (i32, i32) {
    %c0_i32 = arith.constant 0 : i32
    %c0_i32_0 = arith.constant 0 : i32
    return %arg0, %c0_i32 : i32, i32
  }
  func.func @transform_1(%arg0: i32) -> (i32, i32) {
    %c0_i32 = arith.constant 0 : i32
    %c0_i32_0 = arith.constant 0 : i32
    %c0_i32_1 = arith.constant 0 : i32
    return %c0_i32, %c0_i32_0 : i32, i32
  }
  func.func @transform_2(%arg0: i32) -> (i32, i32) {
    %c0_i32 = arith.constant 0 : i32
    %c0_i32_0 = arith.constant 0 : i32
    %c0_i32_1 = arith.constant 0 : i32
    return %c0_i32, %c0_i32_0 : i32, i32
  }
  func.func @transform_3(%arg0: i32) -> (i32, i32) {
    %c0_i32 = arith.constant 0 : i32
    %c0_i32_0 = arith.constant 0 : i32
    %c0_i32_1 = arith.constant 0 : i32
    return %c0_i32, %c0_i32_0 : i32, i32
  }
  func.func @transform_4(%arg0: i32) -> (i32, i32) {
    %c0_i32 = arith.constant 0 : i32
    %c0_i32_0 = arith.constant 0 : i32
    %c0_i32_1 = arith.constant 0 : i32
    return %c0_i32, %c0_i32_0 : i32, i32
  }
  func.func @transform_5(%arg0: i32) -> (i32, i32) {
    %c0_i32 = arith.constant 0 : i32
    %c0_i32_0 = arith.constant 0 : i32
    %c0_i32_1 = arith.constant 0 : i32
    return %c0_i32, %c0_i32_0 : i32, i32
  }
  func.func @transform_6(%arg0: i32) -> (i32, i32) {
    %c0_i32 = arith.constant 0 : i32
    %c0_i32_0 = arith.constant 0 : i32
    %c0_i32_1 = arith.constant 0 : i32
    return %c0_i32, %c0_i32_0 : i32, i32
  }
  func.func @transform_7(%arg0: i32) -> (i32, i32) {
    %c0_i32 = arith.constant 0 : i32
    %c0_i32_0 = arith.constant 0 : i32
    return %arg0, %c0_i32 : i32, i32
  }
}

</mosaic_0001>

<llo_original>
// kernel: mlp_forward.1
$region0: #{mlp_forward.1}
  #allocation0 [shape = 'u32[]', space=smem, size = 0x4, offset = 0x4, fixed_abs, tag = 'smem constant byte address 0x4 - core index']
  #allocation1 [shape = 'u32[144,128]{1,0:T(1,128)}', space=vmem, size = 0x12000, scoped, tag = 'internal scratch']
  %s0 = inlined_call_operand.vmem [shape: f32[2,32], index: 0, kind: input, shape index: {}]
  %s1 = inlined_call_operand.hbm [shape: bf16[32,128], index: 1, kind: input, shape index: {}]
  %s2 = inlined_call_operand.vmem [shape: f32[1,128], index: 2, kind: input, shape index: {}]
  %s3 = inlined_call_operand.vmem [shape: bf16[128,128], index: 3, kind: input, shape index: {}]
  %s4 = inlined_call_operand.vmem [shape: f32[1,128], index: 4, kind: input, shape index: {}]
  %s5 = inlined_call_operand.vmem [shape: bf16[128,8], index: 5, kind: input, shape index: {}]
  %s6 = inlined_call_operand.vmem [shape: f32[1,8], index: 6, kind: input, shape index: {}]
  %s7 = inlined_call_operand.hbm [shape: f32[2,8], index: 7, kind: output, shape index: {}]
  %s8 = sld [smem:[#allocation0]]
  $region42: #{mlp_forward.1} parent=0
    _
  %s10 = ssub.s32 1, %s8
  %s11 = scalar_select 0, %s10, %s8
  $region1: #{mlp_forward.1} parent=0
    #allocation2 [shape = 'u8[8192]{0}', space=vmem, size = 0x2000, scoped, tag = 'input window, operand 1, single buffered']
    #allocation3 [shape = 's32[1]{0}', space=sflag, size = 0x4, scoped, tag = 'scoped memory for mlp_forward.1']
    #allocation4 [shape = 's32[1]{0}', space=sflag, size = 0x4, scoped, tag = 'scoped memory for mlp_forward.1']
    #allocation5 [shape = 'u8[1024]{0}', space=vmem, size = 0x400, scoped, tag = 'output window, operand 0, single buffered']
    %12 = vsyncpa [#allocation3], 0
    %13 = vsyncpa [#allocation4], 0
    // Predicated region
    $region2: #{mlp_forward.1} parent=1 // pred_check
      _
    $region3: #{mlp_forward.1} parent=1 // pred_check_branch
      %15 = sbr.rel (0) target = $region5
    $region4: #{mlp_forward.1} parent=1 // pred_region
      _
    $region5: #{mlp_forward.1} parent=1 // pred_fallthru
      _
    // Predicated region
    $region6: #{mlp_forward.1} parent=1 // pred_check
      _
    $region7: #{mlp_forward.1} parent=1 // pred_check_branch
      %17 = sbr.rel (0) target = $region9
    $region8: #{mlp_forward.1} parent=1 // pred_region
      %s19 = ssub.s32 256, 256
      %20 = vsyncadd [#allocation3], %s19
      %s21 = sshll.u32 [#allocation2], 4
      %s22 = int_to_ptr.vmem [resolvable:$true] %s21
      %27 = dma.hbm_to_vmem [thread:$0]  %s1, 256, %s22, [#allocation3], 64, 64, 4
    $region9: #{mlp_forward.1} parent=1 // pred_fallthru
      _
    // Predicated region
    $region10: #{mlp_forward.1} parent=1 // pred_check
      _
    $region11: #{mlp_forward.1} parent=1 // pred_check_branch
      %29 = sbr.rel (0) target = $region13
    $region12: #{mlp_forward.1} parent=1 // pred_region
      _
    $region13: #{mlp_forward.1} parent=1 // pred_fallthru
      _
    // Predicated region
    $region14: #{mlp_forward.1} parent=1 // pred_check
      _
    $region15: #{mlp_forward.1} parent=1 // pred_check_branch
      %31 = sbr.rel (0) target = $region17
    $region16: #{mlp_forward.1} parent=1 // pred_region
      _
    $region17: #{mlp_forward.1} parent=1 // pred_fallthru
      _
    // Predicated region
    $region18: #{mlp_forward.1} parent=1 // pred_check
      _
    $region19: #{mlp_forward.1} parent=1 // pred_check_branch
      %33 = sbr.rel (0) target = $region21
    $region20: #{mlp_forward.1} parent=1 // pred_region
      _
    $region21: #{mlp_forward.1} parent=1 // pred_fallthru
      _
    // Predicated region
    $region22: #{mlp_forward.1} parent=1 // pred_check
      _
    $region23: #{mlp_forward.1} parent=1 // pred_check_branch
      %35 = sbr.rel (0) target = $region25
    $region24: #{mlp_forward.1} parent=1 // pred_region
      _
    $region25: #{mlp_forward.1} parent=1 // pred_fallthru
      _
    // Predicated region
    $region26: #{mlp_forward.1} parent=1 // pred_check
      _
    $region27: #{mlp_forward.1} parent=1 // pred_check_branch
      %37 = sbr.rel (0) target = $region29
    $region28: #{mlp_forward.1} parent=1 // pred_region
      _
    $region29: #{mlp_forward.1} parent=1 // pred_fallthru
      _
    // Predicated region
    $region30: #{mlp_forward.1} parent=1 // pred_check
      _
    $region31: #{mlp_forward.1} parent=1 // pred_check_branch
      %39 = sbr.rel (0) target = $region33
    $region32: #{mlp_forward.1} parent=1 // pred_region
      %40 = dma.done [#allocation3], 256
    $region33: #{mlp_forward.1} parent=1 // pred_fallthru
      _
    %v42 = vld [vmem:[%s0] sm:$0x3]
    %v43 = vpack.c.bf16 %v42, %v42
    %v44 = vld [vmem:[#allocation2] sm:$0xf]
    %v45 = vld [vmem:[#allocation2 + $0x4] sm:$0xf]
    %v46 = vld [vmem:[#allocation2 + $0x8] sm:$0xf]
    %v47 = vld [vmem:[#allocation2 + $0xc] sm:$0xf]
    %v48 = vld [vmem:[%s2] sm:$0x1]
    %v50 = vlaneseq
    %v51 = vshrl.u32 %v50, 7
    %v52 = vsub.s32 0, %v51
    %v53 = vrot.slane %v48, %v52
    %v59 = vunpack.c.l.b16 %v44
    %v60 = vunpack.c.l.b16 %v45
    %v61 = vunpack.c.l.b16 %v46
    %v62 = vunpack.c.l.b16 %v47
    %v63 = vpack.c.b16 %v60, %v59
    %v64 = vpack.c.b16 %v62, %v61
    %vm67 = vcmask 261120
    %v69 = vsel %vm67, %v43, 0
    %71 = vmatprep.subr.bf16.mxu0 0
    %72 = vmatpush1.bf16.msra.mxu0 0
    %73 = vmatprep.subr.bf16.mxu0 0
    %74 = vmatpush1.bf16.msra.mxu0 0
    %75 = vmatprep.subr.bf16.mxu0 0
    %76 = vmatpush1.bf16.msra.mxu0 0
    %77 = vmatprep.subr.bf16.mxu0 0
    %78 = vmatpush1.bf16.msra.mxu0 0
    %79 = vmatprep.subr.bf16.mxu0 0
    %80 = vmatpush1.bf16.msra.mxu0 0
    %81 = vmatprep.subr.bf16.mxu0 0
    %82 = vmatpush1.bf16.msra.mxu0 0
    %83 = vmatprep.subr.bf16.mxu0 0
    %84 = vmatpush1.bf16.msra.mxu0 %v64
    %85 = vmatprep.subr.bf16.mxu0 0
    %86 = vmatpush1.bf16.msra.mxu0 %v63
    %87 = vmatprep.subr.bf16.mxu0 0
    %88 = vmatpush2.bf16.msra.mxu0 0
    %89 = vmatprep.subr.bf16.mxu0 0
    %90 = vmatpush2.bf16.msra.mxu0 0
    %91 = vmatprep.subr.bf16.mxu0 0
    %92 = vmatpush2.bf16.msra.mxu0 0
    %93 = vmatprep.subr.bf16.mxu0 0
    %94 = vmatpush2.bf16.msra.mxu0 0
    %95 = vmatprep.subr.bf16.mxu0 0
    %96 = vmatpush2.bf16.msra.mxu0 0
    %97 = vmatprep.subr.bf16.mxu0 0
    %98 = vmatpush2.bf16.msra.mxu0 0
    %99 = vmatprep.subr.bf16.mxu0 0
    %100 = vmatpush2.bf16.msra.mxu0 0
    %101 = vmatprep.subr.bf16.mxu0 0
    %102 = vmatpush2.bf16.msra.mxu0 0
    %103 = vmatprep.mubr.bf16.mxu0 0
    %104 = vmatmul.mubr.bf16.gmra.mxu0 %v69
    %v105 = vpop.f32.mrf.mxu0
    %v106 = vadd.f32 %v53, %v105
    %v107 = vpop.f32.mrf.mxu0
    %v108 = vpop.f32.mrf.mxu0
    %v109 = vpop.f32.mrf.mxu0
    %110 = vdwg.mxu0
    %v111 = vmax.f32 %v106, 0.0
    %v112 = vpack.c.bf16 %v111, %v111
    %v113 = vld [vmem:[%s3] sm:$0xf]
    %v114 = vld [vmem:[%s3 + $0x4] sm:$0xf]
    %v115 = vld [vmem:[%s3 + $0x8] sm:$0xf]
    %v116 = vld [vmem:[%s3 + $0xc] sm:$0xf]
    %v117 = vld [vmem:[%s3 + $0x10] sm:$0xf]
    %v118 = vld [vmem:[%s3 + $0x14] sm:$0xf]
    %v119 = vld [vmem:[%s3 + $0x18] sm:$0xf]
    %v120 = vld [vmem:[%s3 + $0x1c] sm:$0xf]
    %v121 = vld [vmem:[%s3 + $0x20] sm:$0xf]
    %v122 = vld [vmem:[%s3 + $0x24] sm:$0xf]
    %v123 = vld [vmem:[%s3 + $0x28] sm:$0xf]
    %v124 = vld [vmem:[%s3 + $0x2c] sm:$0xf]
    %v125 = vld [vmem:[%s3 + $0x30] sm:$0xf]
    %v126 = vld [vmem:[%s3 + $0x34] sm:$0xf]
    %v127 = vld [vmem:[%s3 + $0x38] sm:$0xf]
    %v128 = vld [vmem:[%s3 + $0x3c] sm:$0xf]
    %v129 = vld [vmem:[%s4] sm:$0x1]
    %v131 = vlaneseq
    %v132 = vshrl.u32 %v131, 7
    %v133 = vsub.s32 0, %v132
    %v134 = vrot.slane %v129, %v133
    %v152 = vunpack.c.l.b16 %v113
    %v153 = vunpack.c.l.b16 %v114
    %v154 = vunpack.c.l.b16 %v115
    %v155 = vunpack.c.l.b16 %v116
    %v156 = vunpack.c.l.b16 %v117
    %v157 = vunpack.c.l.b16 %v118
    %v158 = vunpack.c.l.b16 %v119
    %v159 = vunpack.c.l.b16 %v120
    %v160 = vunpack.c.l.b16 %v121
    %v161 = vunpack.c.l.b16 %v122
    %v162 = vunpack.c.l.b16 %v123
    %v163 = vunpack.c.l.b16 %v124
    %v164 = vunpack.c.l.b16 %v125
    %v165 = vunpack.c.l.b16 %v126
    %v166 = vunpack.c.l.b16 %v127
    %v167 = vunpack.c.l.b16 %v128
    %v168 = vpack.c.b16 %v153, %v152
    %v169 = vpack.c.b16 %v155, %v154
    %v170 = vpack.c.b16 %v157, %v156
    %v171 = vpack.c.b16 %v159, %v158
    %v172 = vpack.c.b16 %v161, %v160
    %v173 = vpack.c.b16 %v163, %v162
    %v174 = vpack.c.b16 %v165, %v164
    %v175 = vpack.c.b16 %v167, %v166
    %184 = vmatprep.subr.bf16.mxu0 0
    %185 = vmatpush1.bf16.msra.mxu0 %v175
    %186 = vmatprep.subr.bf16.mxu0 0
    %187 = vmatpush1.bf16.msra.mxu0 %v174
    %188 = vmatprep.subr.bf16.mxu0 0
    %189 = vmatpush1.bf16.msra.mxu0 %v173
    %190 = vmatprep.subr.bf16.mxu0 0
    %191 = vmatpush1.bf16.msra.mxu0 %v172
    %192 = vmatprep.subr.bf16.mxu0 0
    %193 = vmatpush1.bf16.msra.mxu0 %v171
    %194 = vmatprep.subr.bf16.mxu0 0
    %195 = vmatpush1.bf16.msra.mxu0 %v170
    %196 = vmatprep.subr.bf16.mxu0 0
    %197 = vmatpush1.bf16.msra.mxu0 %v169
    %198 = vmatprep.subr.bf16.mxu0 0
    %199 = vmatpush1.bf16.msra.mxu0 %v168
    %200 = vmatprep.subr.bf16.mxu0 0
    %201 = vmatpush2.bf16.msra.mxu0 0
    %202 = vmatprep.subr.bf16.mxu0 0
    %203 = vmatpush2.bf16.msra.mxu0 0
    %204 = vmatprep.subr.bf16.mxu0 0
    %205 = vmatpush2.bf16.msra.mxu0 0
    %206 = vmatprep.subr.bf16.mxu0 0
    %207 = vmatpush2.bf16.msra.mxu0 0
    %208 = vmatprep.subr.bf16.mxu0 0
    %209 = vmatpush2.bf16.msra.mxu0 0
    %210 = vmatprep.subr.bf16.mxu0 0
    %211 = vmatpush2.bf16.msra.mxu0 0
    %212 = vmatprep.subr.bf16.mxu0 0
    %213 = vmatpush2.bf16.msra.mxu0 0
    %214 = vmatprep.subr.bf16.mxu0 0
    %215 = vmatpush2.bf16.msra.mxu0 0
    %216 = vmatprep.mubr.bf16.mxu0 0
    %217 = vmatmul.mubr.bf16.gmra.mxu0 %v112
    %v218 = vpop.f32.mrf.mxu0
    %v219 = vadd.f32 %v134, %v218
    %v220 = vpop.f32.mrf.mxu0
    %v221 = vpop.f32.mrf.mxu0
    %v222 = vpop.f32.mrf.mxu0
    %223 = vdwg.mxu0
    %v224 = vmax.f32 %v219, 0.0
    %v225 = vpack.c.bf16 %v224, %v224
    %v226 = vld [vmem:[%s5] sm:$0xf]
    %v227 = vld [vmem:[%s5 + $0x4] sm:$0xf]
    %v228 = vld [vmem:[%s5 + $0x8] sm:$0xf]
    %v229 = vld [vmem:[%s5 + $0xc] sm:$0xf]
    %v230 = vld [vmem:[%s5 + $0x10] sm:$0xf]
    %v231 = vld [vmem:[%s5 + $0x14] sm:$0xf]
    %v232 = vld [vmem:[%s5 + $0x18] sm:$0xf]
    %v233 = vld [vmem:[%s5 + $0x1c] sm:$0xf]
    %v234 = vld [vmem:[%s5 + $0x20] sm:$0xf]
    %v235 = vld [vmem:[%s5 + $0x24] sm:$0xf]
    %v236 = vld [vmem:[%s5 + $0x28] sm:$0xf]
    %v237 = vld [vmem:[%s5 + $0x2c] sm:$0xf]
    %v238 = vld [vmem:[%s5 + $0x30] sm:$0xf]
    %v239 = vld [vmem:[%s5 + $0x34] sm:$0xf]
    %v240 = vld [vmem:[%s5 + $0x38] sm:$0xf]
    %v241 = vld [vmem:[%s5 + $0x3c] sm:$0xf]
    %v242 = vld [vmem:[%s6] sm:$0x1]
    %v244 = vlaneseq
    %v245 = vshrl.u32 %v244, 7
    %v246 = vsub.s32 0, %v245
    %v247 = vrot.slane %v242, %v246
    %v265 = vunpack.c.l.b16 %v226
    %v266 = vunpack.c.l.b16 %v227
    %v267 = vunpack.c.l.b16 %v228
    %v268 = vunpack.c.l.b16 %v229
    %v269 = vunpack.c.l.b16 %v230
    %v270 = vunpack.c.l.b16 %v231
    %v271 = vunpack.c.l.b16 %v232
    %v272 = vunpack.c.l.b16 %v233
    %v273 = vunpack.c.l.b16 %v234
    %v274 = vunpack.c.l.b16 %v235
    %v275 = vunpack.c.l.b16 %v236
    %v276 = vunpack.c.l.b16 %v237
    %v277 = vunpack.c.l.b16 %v238
    %v278 = vunpack.c.l.b16 %v239
    %v279 = vunpack.c.l.b16 %v240
    %v280 = vunpack.c.l.b16 %v241
    %v281 = vpack.c.b16 %v266, %v265
    %v282 = vpack.c.b16 %v268, %v267
    %v283 = vpack.c.b16 %v270, %v269
    %v284 = vpack.c.b16 %v272, %v271
    %v285 = vpack.c.b16 %v274, %v273
    %v286 = vpack.c.b16 %v276, %v275
    %v287 = vpack.c.b16 %v278, %v277
    %v288 = vpack.c.b16 %v280, %v279
    %297 = vmatprep.subr.bf16.mxu0 0
    %298 = vmatpush1.bf16.msra.mxu0 %v288
    %299 = vmatprep.subr.bf16.mxu0 0
    %300 = vmatpush1.bf16.msra.mxu0 %v287
    %301 = vmatprep.subr.bf16.mxu0 0
    %302 = vmatpush1.bf16.msra.mxu0 %v286
    %303 = vmatprep.subr.bf16.mxu0 0
    %304 = vmatpush1.bf16.msra.mxu0 %v285
    %305 = vmatprep.subr.bf16.mxu0 0
    %306 = vmatpush1.bf16.msra.mxu0 %v284
    %307 = vmatprep.subr.bf16.mxu0 0
    %308 = vmatpush1.bf16.msra.mxu0 %v283
    %309 = vmatprep.subr.bf16.mxu0 0
    %310 = vmatpush1.bf16.msra.mxu0 %v282
    %311 = vmatprep.subr.bf16.mxu0 0
    %312 = vmatpush1.bf16.msra.mxu0 %v281
    %313 = vmatprep.subr.bf16.mxu0 0
    %314 = vmatpush2.bf16.msra.mxu0 0
    %315 = vmatprep.subr.bf16.mxu0 0
    %316 = vmatpush2.bf16.msra.mxu0 0
    %317 = vmatprep.subr.bf16.mxu0 0
    %318 = vmatpush2.bf16.msra.mxu0 0
    %319 = vmatprep.subr.bf16.mxu0 0
    %320 = vmatpush2.bf16.msra.mxu0 0
    %321 = vmatprep.subr.bf16.mxu0 0
    %322 = vmatpush2.bf16.msra.mxu0 0
    %323 = vmatprep.subr.bf16.mxu0 0
    %324 = vmatpush2.bf16.msra.mxu0 0
    %325 = vmatprep.subr.bf16.mxu0 0
    %326 = vmatpush2.bf16.msra.mxu0 0
    %327 = vmatprep.subr.bf16.mxu0 0
    %328 = vmatpush2.bf16.msra.mxu0 0
    %329 = vmatprep.mubr.bf16.mxu0 0
    %330 = vmatmul.mubr.bf16.gmra.mxu0 %v225
    %v331 = vpop.f32.mrf.mxu0
    %v332 = vadd.f32 %v247, %v331
    %v333 = vpop.f32.mrf.mxu0
    %v334 = vpop.f32.mrf.mxu0
    %v335 = vpop.f32.mrf.mxu0
    %336 = vdwg.mxu0
    %vm337 = vcmask 58368
    %338 = vst.msk [vmem:[#allocation5] sm:$0x3] %vm337, %v332
    // Predicated region
    $region34: #{mlp_forward.1} parent=1 // pred_check
      _
    $region35: #{mlp_forward.1} parent=1 // pred_check_branch
      %340 = sbr.rel (0) target = $region37
    $region36: #{mlp_forward.1} parent=1 // pred_region
      %s342 = ssub.s32 32, 32
      %343 = vsyncadd [#allocation4], %s342
      %s345 = sshll.u32 [#allocation5], 4
      %s346 = int_to_ptr.vmem [resolvable:$true] %s345
      %348 = dma.vmem_to_hbm [thread:$0]  %s346, 32, %s7, [#allocation4]
    $region37: #{mlp_forward.1} parent=1 // pred_fallthru
      _
    // Predicated region
    $region38: #{mlp_forward.1} parent=1 // pred_check
      _
    $region39: #{mlp_forward.1} parent=1 // pred_check_branch
      %350 = sbr.rel (0) target = $region41
    $region40: #{mlp_forward.1} parent=1 // pred_region
      %351 = dma.done [#allocation4], 32
    $region41: #{mlp_forward.1} parent=1 // pred_fallthru
      _
    %352 = vsyncpa [#allocation3], 1
    %353 = vsyncpa [#allocation4], 1

</llo_original>
